<compile_context>
chip_gen: v5e
topology: v5e:2x2
jax: 0.10.0
libtpu: 0.0.40
codegen_flags: <defaults>
</compile_context>

<pallas_src>
import functools

import jax
import jax.numpy as jnp
from jax.experimental import pallas as pl
from jax.experimental.pallas import tpu as pltpu


def _round_up(x: int, m: int) -> int:
    return ((x + m - 1) // m) * m


_TM_CAP = 2048  # per review: grow row tiles toward 1-2k when E is small


def _tpu_vmem_and_cores():
    """(vmem_limit_bytes, multi_core) derived from the attached TPU generation."""
    try:
        kind = jax.devices()[0].device_kind.lower()
    except Exception:
        kind = ""
    if "v7" in kind or "7x" in kind:
        # v7x: 64 MiB VMEM per TensorCore, 2 TCs per chip -> leave compiler headroom.
        return 48 * 1024 * 1024, True
    if "lite" in kind or "v5e" in kind or "v6e" in kind or "v6 " in kind:
        # v5e / v6e: 128 MiB VMEM, single TensorCore.
        return 96 * 1024 * 1024, False
    # v4 / v5p / unknown: conservative VMEM cap, assume a 2-core (megacore) part.
    return 48 * 1024 * 1024, True


def _choose_tm(M, E_pad, Cp, x_itemsize, out_itemsize, vmem_limit, multi_core):
    """Pick the row-tile TM from the VMEM budget and the sublane packing."""
    # Sublane packing: f32 -> 8 rows, bf16 -> 16, int8/fp8 -> 32.
    sub = max(8, 32 // x_itemsize, 32 // out_itemsize)
    budget = (2 * vmem_limit) // 3                     # keep headroom for the compiler
    resident = E_pad * Cp * x_itemsize + Cp * 4        # single-buffered weight + bias
    per_row = 2 * E_pad * x_itemsize + 2 * Cp * out_itemsize   # dbl-buffered x + out
    avail = max(budget - resident, per_row * sub)
    tm = min(_TM_CAP, (avail // per_row) // sub * sub)
    tm = max(tm, sub)
    # Never make the tile bigger than the (sublane-aligned) problem.
    tm = min(tm, _round_up(M, sub))
    if multi_core:
        # Keep >= 2 row blocks (when M allows) so the "parallel" row axis can be
        # sharded across both TensorCores instead of idling one of them.
        half = _round_up((M + 1) // 2, sub)
        tm = min(tm, max(half, sub))
    return tm


def _tagger_decode_kernel(x_ref, w_ref, b_ref, o_ref):
    # x_ref: (TM, E_pad)  compute dtype
    # w_ref: (E_pad, Cp)  compute dtype (pre-transposed, loop-invariant, single-buffered)
    # b_ref: (1, Cp)      f32           (loop-invariant, single-buffered)
    # o_ref: (TM, Cp)     output dtype
    acc = jnp.dot(x_ref[...], w_ref[...], preferred_element_type=jnp.float32)
    o_ref[...] = (acc + b_ref[...]).astype(o_ref.dtype)


@functools.partial(jax.jit, static_argnames=("compute_dtype", "out_dtype"))
def sequence_tagger_decode(encoded_sentences, weight, bias,
                           compute_dtype=None, out_dtype=None):
    """Pallas implementation of SequenceTagger.decode (the decoder Linear).

    encoded_sentences: (B, S, E)  encoder word-level representations.  For the
                       bandwidth-optimal path, pass them already in bf16 (emit the
                       encoder output in bf16 upstream) instead of using compute_dtype.
    weight:            (C, E)     nn.Linear weight layout.
    bias:              (C,)
    compute_dtype:     None -> use the input dtype as-is (no wrapper cast).  If given
                       and different, the wrapper casts (extra HBM pass; prefer
                       casting upstream).
    out_dtype:         None -> float32 logits (exact module semantics); jnp.bfloat16
                       halves the (padded) output write when the consumer tolerates it.
    returns logits:    (B, S, C) in out_dtype.
    """
    B, S, E = encoded_sentences.shape
    C = weight.shape[0]
    M = B * S

    cdt = encoded_sentences.dtype if compute_dtype is None else jnp.dtype(compute_dtype)
    odt = jnp.float32 if out_dtype is None else jnp.dtype(out_dtype)

    x2 = encoded_sentences.reshape(M, E)
    if x2.dtype != cdt:
        # NOTE: extra HBM pass over (M, E); prefer emitting the encoder output in `cdt`.
        x2 = x2.astype(cdt)

    # Lane-dense class dim (tagsets are small: Cp is usually exactly 128).
    Cp = _round_up(max(C, 128), 128)
    # Guard: pad E to a lane multiple only if the encoder width is misaligned
    # (production widths are 128-aligned; the demo E=32 exercises this path).
    E_pad = _round_up(E, 128)
    if E_pad != E:
        x2 = jnp.pad(x2, ((0, 0), (0, E_pad - E)))

    # Pre-transpose weight once to (E, C); zero-pad E and C.  Padded logits are exactly
    # bias=0 and get sliced off below.
    w_t = jnp.pad(weight.T.astype(cdt), ((0, E_pad - E), (0, Cp - C)))
    b2 = jnp.pad(bias.astype(jnp.float32).reshape(1, C), ((0, 0), (0, Cp - C)))

    vmem_limit, multi_core = _tpu_vmem_and_cores()
    x_isz = jnp.dtype(cdt).itemsize
    o_isz = jnp.dtype(odt).itemsize
    TM = _choose_tm(M, E_pad, Cp, x_isz, o_isz, vmem_limit, multi_core)
    grid = ((M + TM - 1) // TM,)   # ragged last block is masked by Pallas (no jnp.pad)

    bytes_accessed = (M * E_pad * x_isz          # activations read
                      + E_pad * Cp * x_isz       # weight read (resident)
                      + Cp * 4                   # bias
                      + M * Cp * o_isz)          # logits written

    out = pl.pallas_call(
        _tagger_decode_kernel,
        out_shape=jax.ShapeDtypeStruct((M, Cp), odt),
        grid=grid,
        in_specs=[
            # Activations: tiled over rows, double-buffered by default.
            pl.BlockSpec((TM, E_pad), lambda i: (i, 0)),
            # Weight / bias: constant index_map -> never re-fetched; single-buffer them
            # so the saved VMEM funds a larger activation tile.
            pl.BlockSpec((E_pad, Cp), lambda i: (0, 0), pipeline_mode=pl.Buffered(1)),
            pl.BlockSpec((1, Cp), lambda i: (0, 0), pipeline_mode=pl.Buffered(1)),
        ],
        out_specs=pl.BlockSpec((TM, Cp), lambda i: (i, 0)),
        compiler_params=pltpu.CompilerParams(
            dimension_semantics=("parallel",),   # shard rows across TCs on v7x/megacore
            vmem_limit_bytes=vmem_limit,
        ),
        cost_estimate=pl.CostEstimate(
            flops=2 * M * E_pad * Cp,
            transcendentals=0,
            bytes_accessed=bytes_accessed,
        ),
    )(x2, w_t, b2)

    return out[:, :C].reshape(B, S, C)

    # TODO(synk): if a tagset ever makes Cp >= 256, add an N grid axis (TN=256 on
    # v6e/v7x, 128 on v5e) so the resident weight slab stays bounded.


def init_decoder_params(key, num_classes, embedding_length):
    """Matches the PyTorch module:
    - weight: xavier_uniform_ on shape (num_classes, embedding_length)
    - bias:   PyTorch Linear default uniform(-1/sqrt(fan_in), 1/sqrt(fan_in))
    """
    k_w, k_b = jax.random.split(key)
    fan_in, fan_out = embedding_length, num_classes
    limit_w = jnp.sqrt(6.0 / (fan_in + fan_out))
    weight = jax.random.uniform(
        k_w, (num_classes, embedding_length), jnp.float32, -limit_w, limit_w
    )
    limit_b = 1.0 / jnp.sqrt(jnp.float32(fan_in))
    bias = jax.random.uniform(k_b, (num_classes,), jnp.float32, -limit_b, limit_b)
    return weight, bias


if __name__ == "__main__":
    # Small demo shapes consistent with the module's forward.
    # (At these toy sizes the kernel is overhead-dominated; it is written to scale to
    #  production shapes via VMEM-budgeted row tiling and lane-dense padding.)
    B, S, E, C = 2, 8, 32, 8  # batch, seq (words), embedding_length, num_classes

    key = jax.random.PRNGKey(0)
    k_x, k_p = jax.random.split(key)

    encoded_sentences = jax.random.normal(k_x, (B, S, E), jnp.float32)
    weight, bias = init_decoder_params(k_p, C, E)

    # Reference (plain JAX) for the same forward pass.
    ref = encoded_sentences @ weight.T + bias

    # 1) f32 path: exact module semantics (parity check).
    logits = sequence_tagger_decode(encoded_sentences, weight, bias)
    logits = jax.block_until_ready(logits)
    assert logits.shape == (B, S, C)
    assert logits.dtype == jnp.float32
    assert jnp.allclose(logits, ref, atol=1e-5, rtol=1e-5)

    # 2) Production path: encoder emits bf16 activations upstream (no wrapper cast)
    #    and the head writes bf16 logits.  f32 accumulation on the MXU either way.
    encoded_bf16 = encoded_sentences.astype(jnp.bfloat16)  # stands in for a bf16 encoder
    logits_bf16 = sequence_tagger_decode(
        encoded_bf16, weight, bias, out_dtype=jnp.bfloat16
    )
    logits_bf16 = jax.block_until_ready(logits_bf16)
    assert logits_bf16.shape == (B, S, C)
    assert logits_bf16.dtype == jnp.bfloat16
    assert jnp.allclose(logits_bf16.astype(jnp.float32), ref, atol=1e-1, rtol=1e-1)

    print("KERNEL_OK")
</pallas_src>

<mosaic_0001>
module attributes {stable_mosaic.version = 11 : i64} {
  func.func @_tagger_decode_kernel(%arg0: i32, %arg1: memref<8x128xf32, #tpu.memory_space<vmem>>, %arg2: memref<128x128xf32, #tpu.memory_space<vmem>>, %arg3: memref<1x128xf32, #tpu.memory_space<vmem>>, %arg4: memref<8x128xf32, #tpu.memory_space<vmem>>) attributes {dimension_semantics = [#tpu.dimension_semantics<parallel>], iteration_bounds = array<i64: 2>, scalar_prefetch = 0 : i64, scratch_operands = 0 : i64, tpu.core_type = #tpu.core_type<tc>, window_params = [{transform_indices = @transform_0, window_bounds = array<i64: 8, 128>}, {pipeline_mode = #tpu.pipeline_mode<synchronous>, transform_indices = @transform_1, window_bounds = array<i64: 128, 128>}, {pipeline_mode = #tpu.pipeline_mode<synchronous>, transform_indices = @transform_2, window_bounds = array<i64: 1, 128>}, {transform_indices = @transform_3, window_bounds = array<i64: 8, 128>}]} {
    %c0 = arith.constant 0 : index
    %c0_0 = arith.constant 0 : index
    %0 = vector.load %arg1[%c0, %c0_0] : memref<8x128xf32, #tpu.memory_space<vmem>>, vector<8x128xf32>
    %c0_1 = arith.constant 0 : index
    %c0_2 = arith.constant 0 : index
    %1 = vector.load %arg2[%c0_1, %c0_2] : memref<128x128xf32, #tpu.memory_space<vmem>>, vector<128x128xf32>
    %cst = arith.constant dense<0.000000e+00> : vector<8x128xf32>
    %2 = tpu.matmul %0, %1, %cst {dimension_numbers = #tpu.dot_dimension_numbers<[1], [0], [0], [1], [0, 0, 1, 1], [], []>} : vector<8x128xf32>, vector<128x128xf32>, vector<8x128xf32> -> vector<8x128xf32>
    %c0_3 = arith.constant 0 : index
    %c0_4 = arith.constant 0 : index
    %3 = vector.load %arg3[%c0_3, %c0_4] : memref<1x128xf32, #tpu.memory_space<vmem>>, vector<1x128xf32>
    %4 = vector.broadcast %3 : vector<1x128xf32> to vector<8x128xf32>
    %5 = arith.addf %2, %4 : vector<8x128xf32>
    %c0_5 = arith.constant 0 : index
    %c0_6 = arith.constant 0 : index
    %6 = vector.load %arg4[%c0_5, %c0_6] : memref<8x128xf32, #tpu.memory_space<vmem>>, vector<8x128xf32>
    tpu.vector_store %arg4[%c0_5, %c0_6], %5 {strides = array<i32>} : memref<8x128xf32, #tpu.memory_space<vmem>>, vector<8x128xf32>,
    return
  }
  func.func @transform_0(%arg0: i32) -> (i32, i32) {
    %c0_i32 = arith.constant 0 : i32
    %c0_i32_0 = arith.constant 0 : i32
    return %arg0, %c0_i32 : i32, i32
  }
  func.func @transform_1(%arg0: i32) -> (i32, i32) {
    %c0_i32 = arith.constant 0 : i32
    %c0_i32_0 = arith.constant 0 : i32
    %c0_i32_1 = arith.constant 0 : i32
    return %c0_i32, %c0_i32_0 : i32, i32
  }
  func.func @transform_2(%arg0: i32) -> (i32, i32) {
    %c0_i32 = arith.constant 0 : i32
    %c0_i32_0 = arith.constant 0 : i32
    %c0_i32_1 = arith.constant 0 : i32
    return %c0_i32, %c0_i32_0 : i32, i32
  }
  func.func @transform_3(%arg0: i32) -> (i32, i32) {
    %c0_i32 = arith.constant 0 : i32
    %c0_i32_0 = arith.constant 0 : i32
    return %arg0, %c0_i32 : i32, i32
  }
}

</mosaic_0001>

<llo_original>
// kernel: sequence_tagger_decode.1
$region0: #{sequence_tagger_decode.1}
  #allocation0 [shape = 'u32[]', space=smem, size = 0x4, offset = 0x4, fixed_abs, tag = 'smem constant byte address 0x4 - core index']
  #allocation1 [shape = 'u32[72,128]{1,0:T(1,128)}', space=vmem, size = 0x9000, scoped, tag = 'internal scratch']
  %s0 = inlined_call_operand.vmem [shape: f32[16,128], index: 0, kind: input, shape index: {}]
  %s1 = inlined_call_operand.vmem [shape: f32[128,128], index: 1, kind: input, shape index: {}]
  %s2 = inlined_call_operand.vmem [shape: f32[1,128], index: 2, kind: input, shape index: {}]
  %s3 = inlined_call_operand.vmem [shape: f32[16,128], index: 3, kind: output, shape index: {}]
  %s4 = sld [smem:[#allocation0]]
  $region45: #{sequence_tagger_decode.1} parent=0
    _
  %s6 = ssub.s32 1, %s4
  %s7 = scalar_select 0, %s6, %s4
  loop: start=0, step=1, limit=4
  $region2: #{sequence_tagger_decode.1} parent=0 // loop_pre_header
    _
  $region3: #{sequence_tagger_decode.1} parent=0 // loop_header
    %s9 = sphi 0, %s13
    %p10 = scmp.ge.s32.totalorder %s9, 4
    %s19 = sphi 0, %s21
    %s22 = sphi 0, %s19
    %s23 = sphi 0, %s22
    %s39 = sphi 0, %s23
    %s43 = sphi 0, %s43
    %s45 = sphi 0, %s43
    %s46 = sphi 0, %s45
    %s60 = sphi 0, %s46
    %s64 = sphi 0, %s64
    %s66 = sphi 0, %s64
    %s67 = sphi 0, %s66
    %s81 = sphi 0, %s67
    %s87 = sphi 0, %s89
    %s90 = sphi 0, %s87
    %s91 = sphi 0, %s90
    %s107 = sphi 0, %s91
  $region4: #{sequence_tagger_decode.1} parent=0 // loop_header_branch
    %12 = sbr.rel (%p10) target = $region8
  $region5: #{sequence_tagger_decode.1} parent=0 // loop_body
    %s14 = ssub.s32 %s9, 1
    %s15 = ssub.s32 %s9, 2
    %s16 = sadd.s32 %s9, 1
    %s17 = ssub.s32 %s9, %s16
    %p18 = scmp.eq.s32.totalorder %s17, 0
    %s20 = sadd.s32 %s19, 1
    %s21 = scalar_select %p18, %s19, %s20
    %p24 = pneg %p18
    %p25 = scmp.eq.s32.totalorder %s9, 1
    %p26 = por %p24, %p25
    %p27 = scmp.ne.s32.totalorder %s19, %s22
    %p28 = scmp.eq.s32.totalorder %s9, 0
    %p29 = por %p27, %p28
    %p30 = scmp.ne.s32.totalorder %s19, %s22
    %p31 = scmp.eq.s32.totalorder %s14, 1
    %p32 = por %p30, %p31
    %p33 = scmp.ne.s32.totalorder %s22, %s23
    %p34 = scmp.eq.s32.totalorder %s14, 0
    %p35 = por %p33, %p34
    %p36 = scmp.ne.s32.totalorder %s22, %s23
    %p37 = scmp.eq.s32.totalorder %s15, 1
    %p38 = por %p36, %p37
    %p40 = scmp.ne.s32.totalorder %s23, %s39
    %p41 = scmp.eq.s32.totalorder %s15, 0
    %p42 = por %p40, %p41
    %s44 = sadd.s32 %s43, 1
    %p47 = scmp.eq.s32.totalorder %s9, 1
    %p48 = scmp.ne.s32.totalorder %s43, %s45
    %p49 = scmp.eq.s32.totalorder %s9, 0
    %p50 = por %p48, %p49
    %p51 = scmp.ne.s32.totalorder %s43, %s45
    %p52 = scmp.eq.s32.totalorder %s14, 1
    %p53 = por %p51, %p52
    %p54 = scmp.ne.s32.totalorder %s45, %s46
    %p55 = scmp.eq.s32.totalorder %s14, 0
    %p56 = por %p54, %p55
    %p57 = scmp.ne.s32.totalorder %s45, %s46
    %p58 = scmp.eq.s32.totalorder %s15, 1
    %p59 = por %p57, %p58
    %p61 = scmp.ne.s32.totalorder %s46, %s60
    %p62 = scmp.eq.s32.totalorder %s15, 0
    %p63 = por %p61, %p62
    %s65 = sadd.s32 %s64, 1
    %p68 = scmp.eq.s32.totalorder %s9, 1
    %p69 = scmp.ne.s32.totalorder %s64, %s66
    %p70 = scmp.eq.s32.totalorder %s9, 0
    %p71 = por %p69, %p70
    %p72 = scmp.ne.s32.totalorder %s64, %s66
    %p73 = scmp.eq.s32.totalorder %s14, 1
    %p74 = por %p72, %p73
    %p75 = scmp.ne.s32.totalorder %s66, %s67
    %p76 = scmp.eq.s32.totalorder %s14, 0
    %p77 = por %p75, %p76
    %p78 = scmp.ne.s32.totalorder %s66, %s67
    %p79 = scmp.eq.s32.totalorder %s15, 1
    %p80 = por %p78, %p79
    %p82 = scmp.ne.s32.totalorder %s67, %s81
    %p83 = scmp.eq.s32.totalorder %s15, 0
    %p84 = por %p82, %p83
    %s85 = ssub.s32 %s9, %s16
    %p86 = scmp.eq.s32.totalorder %s85, 0
    %s88 = sadd.s32 %s87, 1
    %s89 = scalar_select %p86, %s87, %s88
    %p92 = pneg %p86
    %p93 = scmp.eq.s32.totalorder %s9, 1
    %p94 = por %p92, %p93
    %p95 = scmp.ne.s32.totalorder %s87, %s90
    %p96 = scmp.eq.s32.totalorder %s9, 0
    %p97 = por %p95, %p96
    %p98 = scmp.ne.s32.totalorder %s87, %s90
    %p99 = scmp.eq.s32.totalorder %s14, 1
    %p100 = por %p98, %p99
    %p101 = scmp.ne.s32.totalorder %s90, %s91
    %p102 = scmp.eq.s32.totalorder %s14, 0
    %p103 = por %p101, %p102
    %p104 = scmp.ne.s32.totalorder %s90, %s91
    %p105 = scmp.eq.s32.totalorder %s15, 1
    %p106 = por %p104, %p105
    %p108 = scmp.ne.s32.totalorder %s91, %s107
    %p109 = scmp.eq.s32.totalorder %s15, 0
    %p110 = por %p108, %p109
    %p111 = scmp.le.s32.totalorder 1, %s9
    %p112 = scmp.lt.s32.totalorder %s9, 3
    %p113 = pnand %p111, %p112
    %p114 = pneg %p113
    // Predicated region
    $region9: #{sequence_tagger_decode.1} parent=5 // pred_check
      _
    $region10: #{sequence_tagger_decode.1} parent=5 // pred_check_branch
      %116 = sbr.rel (%p113) target = $region12
    $region11: #{sequence_tagger_decode.1} parent=5 // pred_region
      %s117 = ssub.s32 %s9, 1
      // Predicated region
      $region13: #{sequence_tagger_decode.1} parent=11 // pred_check
        %p118 = pneg %p56
      $region14: #{sequence_tagger_decode.1} parent=11 // pred_check_branch
        %120 = sbr.rel (%p118) target = $region16
      $region15: #{sequence_tagger_decode.1} parent=11 // pred_region
        _
      $region16: #{sequence_tagger_decode.1} parent=11 // pred_fallthru
        _
      // Predicated region
      $region17: #{sequence_tagger_decode.1} parent=11 // pred_check
        %p121 = pneg %p77
      $region18: #{sequence_tagger_decode.1} parent=11 // pred_check_branch
        %123 = sbr.rel (%p121) target = $region20
      $region19: #{sequence_tagger_decode.1} parent=11 // pred_region
        _
      $region20: #{sequence_tagger_decode.1} parent=11 // pred_fallthru
        _
    $region12: #{sequence_tagger_decode.1} parent=5 // pred_fallthru
      _
    %p124 = scmp.lt.s32.totalorder %s9, 2
    // Predicated region
    $region21: #{sequence_tagger_decode.1} parent=5 // pred_check
      %p125 = pneg %p124
    $region22: #{sequence_tagger_decode.1} parent=5 // pred_check_branch
      %127 = sbr.rel (%p125) target = $region24
    $region23: #{sequence_tagger_decode.1} parent=5 // pred_region
      // Predicated region
      $region25: #{sequence_tagger_decode.1} parent=23 // pred_check
        %p128 = pneg %p29
      $region26: #{sequence_tagger_decode.1} parent=23 // pred_check_branch
        %130 = sbr.rel (%p128) target = $region28
      $region27: #{sequence_tagger_decode.1} parent=23 // pred_region
        %p131 = scmp.lt.s32.totalorder %s9, 1
        %s132 = scalar_select %p131, %s9, 1
        %s133 = smul.addr %s132, 8
        %s134 = scalar_lea.vmem %s0, %s133
      $region28: #{sequence_tagger_decode.1} parent=23 // pred_fallthru
        _
    $region24: #{sequence_tagger_decode.1} parent=5 // pred_fallthru
      _
    %p135 = scmp.le.s32.totalorder 1, %s9
    %p136 = scmp.lt.s32.totalorder %s9, 3
    %p137 = pnand %p135, %p136
    %p138 = pneg %p137
    // Predicated region
    $region29: #{sequence_tagger_decode.1} parent=5 // pred_check
      _
    $region30: #{sequence_tagger_decode.1} parent=5 // pred_check_branch
      %140 = sbr.rel (%p137) target = $region32
    $region31: #{sequence_tagger_decode.1} parent=5 // pred_region
      %s141 = ssub.s32 %s9, 1
      %p142 = scmp.lt.s32.totalorder %s14, 1
      %s143 = scalar_select %p142, %s14, 1
      %s144 = smul.addr %s143, 8
      %s145 = scalar_lea.vmem %s0, %s144
      %p146 = pneg %p35
      %p147 = pneg %p32
      %p148 = pneg %p56
      %p149 = pneg %p53
      %p150 = pneg %p77
      %p151 = pneg %p74
      %p152 = pneg %p103
      %p153 = pneg %p100
      %p154 = scmp.lt.s32.totalorder %s14, 1
      %s155 = scalar_select %p154, %s14, 1
      %s156 = smul.addr %s155, 8
      %s157 = scalar_lea.vmem %s3, %s156
      %p158 = scmp.lt.s32.totalorder %s14, 1
      %s159 = scalar_select %p158, %s14, 1
      %s160 = smul.addr %s159, 8
      %s161 = scalar_lea.vmem %s0, %s160
      %p162 = scmp.lt.s32.totalorder %s14, 1
      %s163 = scalar_select %p162, %s14, 1
      %s164 = smul.addr %s163, 8
      %s165 = scalar_lea.vmem %s3, %s164
      %v166 = vld [vmem:[%s161] sm:$0xff]
      %v167 = vld [vmem:[%s1] sm:$0xff]
      %v168 = vld [vmem:[%s1 + $0x8] sm:$0xff]
      %v169 = vld [vmem:[%s1 + $0x10] sm:$0xff]
      %v170 = vld [vmem:[%s1 + $0x18] sm:$0xff]
      %v171 = vld [vmem:[%s1 + $0x20] sm:$0xff]
      %v172 = vld [vmem:[%s1 + $0x28] sm:$0xff]
      %v173 = vld [vmem:[%s1 + $0x30] sm:$0xff]
      %v174 = vld [vmem:[%s1 + $0x38] sm:$0xff]
      %v175 = vld [vmem:[%s1 + $0x40] sm:$0xff]
      %v176 = vld [vmem:[%s1 + $0x48] sm:$0xff]
      %v177 = vld [vmem:[%s1 + $0x50] sm:$0xff]
      %v178 = vld [vmem:[%s1 + $0x58] sm:$0xff]
      %v179 = vld [vmem:[%s1 + $0x60] sm:$0xff]
      %v180 = vld [vmem:[%s1 + $0x68] sm:$0xff]
      %v181 = vld [vmem:[%s1 + $0x70] sm:$0xff]
      %v182 = vld [vmem:[%s1 + $0x78] sm:$0xff]
      %v183 = vld [vmem:[%s2] sm:$0x1]
      %v185 = vperm.slane %v183, 0
      %187 = vmatpush.msra.mxu0 %v182
      %188 = vmatpush.msra.mxu0 %v181
      %189 = vmatpush.msra.mxu0 %v180
      %190 = vmatpush.msra.mxu0 %v179
      %191 = vmatpush.msra.mxu0 %v178
      %192 = vmatpush.msra.mxu0 %v177
      %193 = vmatpush.msra.mxu0 %v176
      %194 = vmatpush.msra.mxu0 %v175
      %195 = vmatpush.msra.mxu0 %v174
      %196 = vmatpush.msra.mxu0 %v173
      %197 = vmatpush.msra.mxu0 %v172
      %198 = vmatpush.msra.mxu0 %v171
      %199 = vmatpush.msra.mxu0 %v170
      %200 = vmatpush.msra.mxu0 %v169
      %201 = vmatpush.msra.mxu0 %v168
      %202 = vmatpush.msra.mxu0 %v167
      %203 = vmatmul.f32.gmra.mxu0 %v166
      %v204 = vpop.f32.mrf.mxu0
      %v205 = vadd.f32 %v185, %v204
      %206 = vdwg.mxu0
      %207 = vst [vmem:[%s165] sm:$0xff] %v205
      %p208 = scmp.lt.s32.totalorder %s14, 1
      %s209 = scalar_select %p208, %s14, 1
      %s210 = smul.addr %s209, 8
      %s211 = scalar_lea.vmem %s3, %s210
      // Predicated region
      $region33: #{sequence_tagger_decode.1} parent=31 // pred_check
        %p212 = pneg %p100
      $region34: #{sequence_tagger_decode.1} parent=31 // pred_check_branch
        %214 = sbr.rel (%p212) target = $region36
      $region35: #{sequence_tagger_decode.1} parent=31 // pred_region
        _
      $region36: #{sequence_tagger_decode.1} parent=31 // pred_fallthru
        _
    $region32: #{sequence_tagger_decode.1} parent=5 // pred_fallthru
      _
    %p215 = scmp.le.s32.totalorder 2, %s9
    // Predicated region
    $region37: #{sequence_tagger_decode.1} parent=5 // pred_check
      %p216 = pneg %p215
    $region38: #{sequence_tagger_decode.1} parent=5 // pred_check_branch
      %218 = sbr.rel (%p216) target = $region40
    $region39: #{sequence_tagger_decode.1} parent=5 // pred_region
      %s219 = ssub.s32 %s9, 2
      // Predicated region
      $region41: #{sequence_tagger_decode.1} parent=39 // pred_check
        %p220 = pneg %p106
      $region42: #{sequence_tagger_decode.1} parent=39 // pred_check_branch
        %222 = sbr.rel (%p220) target = $region44
      $region43: #{sequence_tagger_decode.1} parent=39 // pred_region
        %p223 = scmp.lt.s32.totalorder %s15, 1
        %s224 = scalar_select %p223, %s15, 1
        %s225 = smul.addr %s224, 8
        %s226 = scalar_lea.vmem %s3, %s225
      $region44: #{sequence_tagger_decode.1} parent=39 // pred_fallthru
        _
    $region40: #{sequence_tagger_decode.1} parent=5 // pred_fallthru
      _
  $region6: #{sequence_tagger_decode.1} parent=0 // loop_footer
    %s13 = sadd.s32 1, %s9
  $region7: #{sequence_tagger_decode.1} parent=0 // loop_footer_branch
    %8 = sbr.rel target = $region3
  $region8: #{sequence_tagger_decode.1} parent=0 // loop_exit
    _

</llo_original>
